<compile_context>
chip_gen: v5e
topology: v5e:2x2
jax: 0.10.0
libtpu: 0.0.40
codegen_flags: <defaults>
</compile_context>

<pallas_src>
import numpy as np
import jax
import jax.numpy as jnp
from jax.experimental import pallas as pl
from jax.experimental.pallas import tpu as pltpu


def _round_up(x, m):
    return ((x + m - 1) // m) * m


def _cdiv(a, b):
    return (a + b - 1) // b


def _pick_tile(dim, candidates, base):
    """Largest tile from `candidates` (descending) whose padding overhead is
    modest; returns (tile, padded_dim). `base` is the hardware minimum."""
    min_pad = _round_up(dim, base)
    limit = min_pad + min_pad // 8
    for c in candidates:
        p = _round_up(dim, c)
        if p <= limit:
            return c, p
    return base, min_pad


# ------------------------- Pallas kernels -------------------------

def _matmul_kernel(a_ref, w_ref, o_ref, acc_ref):
    kc = pl.program_id(2)

    @pl.when(kc == 0)
    def _init():
        acc_ref[...] = jnp.zeros_like(acc_ref)

    acc_ref[...] += jnp.dot(a_ref[...], w_ref[...],
                            preferred_element_type=jnp.float32)

    @pl.when(kc == pl.num_programs(2) - 1)
    def _finish():
        o_ref[...] = acc_ref[...].astype(o_ref.dtype)


def _matmul_bias_kernel(a_ref, w_ref, b_ref, o_ref, acc_ref):
    kc = pl.program_id(2)

    @pl.when(kc == 0)
    def _init():
        acc_ref[...] = jnp.zeros_like(acc_ref)

    acc_ref[...] += jnp.dot(a_ref[...], w_ref[...],
                            preferred_element_type=jnp.float32)

    @pl.when(kc == pl.num_programs(2) - 1)
    def _finish():
        o_ref[...] = (acc_ref[...] + b_ref[...]).astype(o_ref.dtype)


def fused_matmul(a, w, bias=None, out_dtype=jnp.float32):
    """a @ w (+ bias).  a: (M, K) (cast to bf16); w: (K, N) bf16; bias (N,) f32."""
    M, K = a.shape
    K2, N = w.shape
    assert K == K2

    tm, Mp = _pick_tile(M, (512, 256, 128, 64, 32, 16), 16)
    tn, Np = _pick_tile(N, (256, 128), 128)
    tk, Kp = _pick_tile(K, (512, 256, 128), 128)

    # Keep >= 2 parallel output tiles so megacore parts (v7x: 2 TCs) can split M.
    if Mp // tm == 1 and Np // tn == 1 and tm > 16:
        tm = max(16, tm // 2)
        Mp = _round_up(M, tm)

    a = a.astype(jnp.bfloat16)
    w = w.astype(jnp.bfloat16)
    a_p = a if (Mp == M and Kp == K) else jnp.pad(a, ((0, Mp - M), (0, Kp - K)))
    w_p = w if (Kp == K and Np == N) else jnp.pad(w, ((0, Kp - K), (0, Np - N)))

    grid = (Mp // tm, Np // tn, Kp // tk)
    in_specs = [pl.BlockSpec((tm, tk), lambda mi, nj, kc: (mi, kc)),
                pl.BlockSpec((tk, tn), lambda mi, nj, kc: (kc, nj))]
    args = [a_p, w_p]
    if bias is not None:
        bias_p = jnp.pad(bias.astype(jnp.float32).reshape(1, N),
                         ((0, 0), (0, Np - N)))
        in_specs.append(pl.BlockSpec((1, tn), lambda mi, nj, kc: (0, nj)))
        args.append(bias_p)
        kernel = _matmul_bias_kernel
    else:
        kernel = _matmul_kernel

    out = pl.pallas_call(
        kernel,
        out_shape=jax.ShapeDtypeStruct((Mp, Np), out_dtype),
        grid=grid,
        in_specs=in_specs,
        out_specs=pl.BlockSpec((tm, tn), lambda mi, nj, kc: (mi, nj)),
        scratch_shapes=[pltpu.VMEM((tm, tn), jnp.float32)],
        compiler_params=pltpu.CompilerParams(
            dimension_semantics=("parallel", "parallel", "arbitrary"),
            vmem_limit_bytes=32 * 1024 * 1024),
    )(*args)
    return out[:M, :N]


def _add_relu_kernel(a_ref, b_ref, o_ref):
    s = a_ref[...].astype(jnp.float32) + b_ref[...].astype(jnp.float32)
    o_ref[...] = jnp.maximum(s, 0.0).astype(o_ref.dtype)


def pallas_add_relu(a, b):
    """Fused, tiled, lane-dense relu(a + b) for same-shape tensors."""
    shape = a.shape
    total = 1
    for s in shape:
        total *= int(s)
    lanes = 512 if total >= 512 * 16 else 128
    rows = _cdiv(total, lanes)
    br, rows_p = _pick_tile(rows, (512, 256, 128, 64, 32, 16), 16)
    total_p = rows_p * lanes

    a1 = jnp.pad(a.reshape(-1), (0, total_p - total)).reshape(rows_p, lanes)
    b1 = jnp.pad(b.reshape(-1), (0, total_p - total)).reshape(rows_p, lanes)

    out = pl.pallas_call(
        _add_relu_kernel,
        out_shape=jax.ShapeDtypeStruct((rows_p, lanes), a.dtype),
        grid=(rows_p // br,),
        in_specs=[pl.BlockSpec((br, lanes), lambda i: (i, 0)),
                  pl.BlockSpec((br, lanes), lambda i: (i, 0))],
        out_specs=pl.BlockSpec((br, lanes), lambda i: (i, 0)),
        compiler_params=pltpu.CompilerParams(
            dimension_semantics=("parallel",),
            vmem_limit_bytes=32 * 1024 * 1024),
    )(a1, b1)
    return out.reshape(-1)[:total].reshape(shape)


# ------------------------- conv / bn / upsample glue -------------------------

def conv2d_nhwc(x, w_mat, kh, kw, padding=(0, 0), dilation=(1, 1), bias=None):
    """Stride-1 conv. x: (N,H,W,Cin) bf16; w_mat: (kh*kw*Cin, Cout) bf16.
    Taps are folded into the contraction dimension (one matmul per conv)."""
    N, H, W, Cin = x.shape
    ph, pw = padding
    dh, dw = dilation
    Ho = H + 2 * ph - dh * (kh - 1)
    Wo = W + 2 * pw - dw * (kw - 1)
    xp = jnp.pad(x, ((0, 0), (ph, ph), (pw, pw), (0, 0))) if (ph or pw) else x
    M = N * Ho * Wo
    if kh == 1 and kw == 1 and ph == 0 and pw == 0:
        a = x.reshape(M, Cin)
    else:
        taps = [xp[:, i * dh:i * dh + Ho, j * dw:j * dw + Wo, :]
                for i in range(kh) for j in range(kw)]
        a = jnp.concatenate(taps, axis=-1).reshape(M, kh * kw * Cin)
    out = fused_matmul(a, w_mat, bias=bias)
    Cout = w_mat.shape[1]
    return out.reshape(N, Ho, Wo, Cout)


def batchnorm_nhwc(x, gamma, beta, eps=1e-5):
    # nn.BatchNorm2d in (default) training mode: batch statistics, biased var.
    # TODO(synk): fuse the affine apply into the consuming matmul's operand load.
    xf = x.astype(jnp.float32)
    mean = jnp.mean(xf, axis=(0, 1, 2), keepdims=True)
    var = jnp.mean(jnp.square(xf - mean), axis=(0, 1, 2), keepdims=True)
    y = (xf - mean) * jax.lax.rsqrt(var + eps) * gamma + beta
    return y.astype(jnp.bfloat16)


def _interp_matrix(O, I):
    """Dense 1-D bilinear (align_corners=True) interpolation matrix (O, I)."""
    if I == 1:
        return np.ones((O, 1), np.float32)
    pos = np.arange(O, dtype=np.float64) * (I - 1) / (O - 1)
    lo = np.minimum(np.floor(pos).astype(np.int64), I - 1)
    hi = np.minimum(lo + 1, I - 1)
    w = (pos - lo).astype(np.float32)
    A = np.zeros((O, I), np.float32)
    A[np.arange(O), lo] += (1.0 - w)
    A[np.arange(O), hi] += w
    return A


def upsample2x_bilinear_align_corners(x):
    # F.interpolate(scale_factor=2, mode='bilinear', align_corners=True), NHWC,
    # expressed as two tiny dense interpolation matmuls (no XLA gathers).
    N, H, W, C = x.shape
    Ah = _interp_matrix(2 * H, H)
    Aw = _interp_matrix(2 * W, W)
    xf = x.astype(jnp.float32)
    return jnp.einsum('oh,nhwc,pw->nopc', Ah, xf, Aw)


# ------------------------- parameter init -------------------------

def init_basic_conv(key, cin, cout, ksize, padding=(0, 0), dilation=(1, 1)):
    kh, kw = (ksize, ksize) if isinstance(ksize, int) else ksize
    fan_in = cin * kh * kw
    bound = 1.0 / (fan_in ** 0.5)
    w = jax.random.uniform(key, (cout, cin, kh, kw), jnp.float32, -bound, bound)
    # Fold taps into K once at init: (Cout,Cin,kh,kw) -> (kh*kw*Cin, Cout), bf16.
    w_mat = jnp.transpose(w, (2, 3, 1, 0)).reshape(kh * kw * cin, cout)
    return {"w": w_mat.astype(jnp.bfloat16), "kh": kh, "kw": kw,
            "padding": padding, "dilation": dilation,
            "gamma": jnp.ones((cout,), jnp.float32),
            "beta": jnp.zeros((cout,), jnp.float32)}


def apply_basic_conv(x, p):
    y = conv2d_nhwc(x, p["w"], p["kh"], p["kw"], p["padding"], p["dilation"])
    return batchnorm_nhwc(y, p["gamma"], p["beta"])


def init_conv1x1(key, cin, cout):
    bound = 1.0 / (cin ** 0.5)
    kw_key, kb_key = jax.random.split(key)
    w = jax.random.uniform(kw_key, (cout, cin, 1, 1), jnp.float32, -bound, bound)
    b = jax.random.uniform(kb_key, (cout,), jnp.float32, -bound, bound)
    w_mat = jnp.transpose(w, (2, 3, 1, 0)).reshape(cin, cout)
    return {"w": w_mat.astype(jnp.bfloat16), "b": b}


def init_ccs(key, cin, cout):
    ks = iter(jax.random.split(key, 20))
    p = {"cout": cout}
    # The 4 branch-entry 1x1 convs + conv_res all consume the same x:
    # pack their weights into one lane-dense (cin, 5*cout) matmul.
    entry = [init_basic_conv(next(ks), cin, cout, 1) for _ in range(5)]
    p["entry_w"] = jnp.concatenate([e["w"] for e in entry], axis=-1)
    p["entry_bn"] = [{"gamma": e["gamma"], "beta": e["beta"]} for e in entry]
    p["branch1_rest"] = [
        init_basic_conv(next(ks), cout, cout, (1, 3), padding=(0, 1)),
        init_basic_conv(next(ks), cout, cout, (3, 1), padding=(1, 0)),
        init_basic_conv(next(ks), cout, cout, 3, padding=(3, 3), dilation=(3, 3)),
        init_basic_conv(next(ks), cout, cout, 3, padding=(3, 3), dilation=(3, 3)),
    ]
    p["branch2_rest"] = [
        init_basic_conv(next(ks), cout, cout, (1, 5), padding=(0, 2)),
        init_basic_conv(next(ks), cout, cout, (5, 1), padding=(2, 0)),
        init_basic_conv(next(ks), cout, cout, 3, padding=(5, 5), dilation=(5, 5)),
        init_basic_conv(next(ks), cout, cout, 3, padding=(5, 5), dilation=(5, 5)),
    ]
    p["branch3_rest"] = [
        init_basic_conv(next(ks), cout, cout, (1, 7), padding=(0, 3)),
        init_basic_conv(next(ks), cout, cout, (7, 1), padding=(3, 0)),
        init_basic_conv(next(ks), cout, cout, 3, padding=(7, 7), dilation=(7, 7)),
        init_basic_conv(next(ks), cout, cout, 3, padding=(7, 7), dilation=(7, 7)),
    ]
    p["conv_cat"] = init_basic_conv(next(ks), 4 * cout, cout, 3, padding=(1, 1))
    return p


def apply_ccs(x, p):
    N, H, W, Cin = x.shape
    cout = p["cout"]
    # One fused matmul for branch0/1/2/3 entry convs + conv_res.
    entry = fused_matmul(x.reshape(N * H * W, Cin), p["entry_w"])
    entry = entry.reshape(N, H, W, 5 * cout)
    chunks = []
    for i, bn in enumerate(p["entry_bn"]):
        z = entry[..., i * cout:(i + 1) * cout]
        chunks.append(batchnorm_nhwc(z, bn["gamma"], bn["beta"]))
    x0, x1, x2, x3, x_res = chunks
    for bp in p["branch1_rest"]:
        x1 = apply_basic_conv(x1, bp)
    for bp in p["branch2_rest"]:
        x2 = apply_basic_conv(x2, bp)
    for bp in p["branch3_rest"]:
        x3 = apply_basic_conv(x3, bp)
    x_cat = apply_basic_conv(jnp.concatenate([x0, x1, x2, x3], axis=-1),
                             p["conv_cat"])
    return pallas_add_relu(x_cat, x_res)


def init_mccs(key, in1, in2, in3, outc):
    c3h = in3 // 2
    c2 = in2 + c3h
    c2h = c2 // 2
    c1 = in1 + c2h
    ks = jax.random.split(key, 8)
    conv_3 = init_conv1x1(ks[3], in3, c3h)
    conv_2 = init_conv1x1(ks[4], c2, c2h)
    conv_out1 = init_conv1x1(ks[5], c1, outc)
    conv_out2 = init_conv1x1(ks[6], c2, outc)
    conv_out3 = init_conv1x1(ks[7], in3, outc)
    return {
        "rfb_1": init_ccs(ks[0], c1, c1),
        "rfb_2": init_ccs(ks[1], c2, c2),
        "rfb_3": init_ccs(ks[2], in3, in3),
        "c3h": c3h, "c2h": c2h, "outc": outc,
        "conv_out1": conv_out1,
        # Fuse 1x1 convs that share an input into one lane-dense matmul.
        "c3_o3": {"w": jnp.concatenate([conv_3["w"], conv_out3["w"]], axis=-1),
                  "b": jnp.concatenate([conv_3["b"], conv_out3["b"]])},
        "c2_o2": {"w": jnp.concatenate([conv_2["w"], conv_out2["w"]], axis=-1),
                  "b": jnp.concatenate([conv_2["b"], conv_out2["b"]])},
    }


def apply_mccs(x1, x2, x3, p):
    # inputs NCHW (PyTorch convention) -> NHWC bf16 internally -> NCHW f32 out
    to_nhwc = lambda t: jnp.transpose(t, (0, 2, 3, 1)).astype(jnp.bfloat16)
    x1, x2, x3 = to_nhwc(x1), to_nhwc(x2), to_nhwc(x3)

    x3_rfb = apply_ccs(x3, p["rfb_3"])
    N3, H3, W3, C3 = x3_rfb.shape
    y3 = fused_matmul(x3_rfb.reshape(-1, C3), p["c3_o3"]["w"],
                      bias=p["c3_o3"]["b"]).reshape(N3, H3, W3, -1)
    x3_conv, out3 = y3[..., :p["c3h"]], y3[..., p["c3h"]:]
    x3_up = upsample2x_bilinear_align_corners(x3_conv).astype(jnp.bfloat16)

    x2_cat = jnp.concatenate([x2, x3_up], axis=-1)
    x2_rfb = apply_ccs(x2_cat, p["rfb_2"])
    N2, H2, W2, C2 = x2_rfb.shape
    y2 = fused_matmul(x2_rfb.reshape(-1, C2), p["c2_o2"]["w"],
                      bias=p["c2_o2"]["b"]).reshape(N2, H2, W2, -1)
    x2_conv, out2 = y2[..., :p["c2h"]], y2[..., p["c2h"]:]
    x2_up = upsample2x_bilinear_align_corners(x2_conv).astype(jnp.bfloat16)

    x1_cat = jnp.concatenate([x1, x2_up], axis=-1)
    x1_rfb = apply_ccs(x1_cat, p["rfb_1"])
    N1, H1, W1, C1 = x1_rfb.shape
    out1 = fused_matmul(x1_rfb.reshape(-1, C1), p["conv_out1"]["w"],
                        bias=p["conv_out1"]["b"]).reshape(N1, H1, W1, -1)

    to_nchw = lambda t: jnp.transpose(t.astype(jnp.float32), (0, 3, 1, 2))
    return to_nchw(out1), to_nchw(out2), to_nchw(out3)


if __name__ == "__main__":
    key = jax.random.PRNGKey(0)
    kp, k1, k2, k3 = jax.random.split(key, 4)

    in1, in2, in3, outc = 8, 8, 8, 4
    B = 2
    # x1 at full res, x2 at half, x3 at quarter (pyramid, as the forward implies)
    x1 = jax.random.normal(k1, (B, in1, 16, 16), jnp.float32)
    x2 = jax.random.normal(k2, (B, in2, 8, 8), jnp.float32)
    x3 = jax.random.normal(k3, (B, in3, 4, 4), jnp.float32)

    params = init_mccs(kp, in1, in2, in3, outc)
    out1, out2, out3 = apply_mccs(x1, x2, x3, params)
    jax.block_until_ready((out1, out2, out3))

    assert out1.shape == (B, outc, 16, 16)
    assert out2.shape == (B, outc, 8, 8)
    assert out3.shape == (B, outc, 4, 4)
    assert all(bool(jnp.isfinite(o).all()) for o in (out1, out2, out3))
    print("KERNEL_OK")
</pallas_src>

<mosaic_0001>
module attributes {stable_mosaic.version = 11 : i64} {
  func.func @_matmul_kernel(%arg0: i32, %arg1: i32, %arg2: i32, %arg3: memref<16x128xbf16, #tpu.memory_space<vmem>>, %arg4: memref<128x128xbf16, #tpu.memory_space<vmem>>, %arg5: memref<16x128xf32, #tpu.memory_space<vmem>>, %arg6: memref<16x128xf32, #tpu.memory_space<vmem>>) attributes {dimension_semantics = [#tpu.dimension_semantics<parallel>, #tpu.dimension_semantics<parallel>, #tpu.dimension_semantics<arbitrary>], iteration_bounds = array<i64: 2, 1, 1>, scalar_prefetch = 0 : i64, scratch_operands = 1 : i64, tpu.core_type = #tpu.core_type<tc>, window_params = [{transform_indices = @transform_0, window_bounds = array<i64: 16, 128>}, {transform_indices = @transform_1, window_bounds = array<i64: 128, 128>}, {transform_indices = @transform_2, window_bounds = array<i64: 16, 128>}]} {
    %c0_i32 = arith.constant 0 : i32
    %0 = arith.cmpi eq, %arg2, %c0_i32 : i32
    %1 = arith.extui %0 : i1 to i32
    %c0_i32_0 = arith.constant 0 : i32
    %2 = arith.cmpi ne, %1, %c0_i32_0 : i32
    scf.if %2 {
      %cst_10 = arith.constant 0.000000e+00 : f32
      %12 = vector.broadcast %cst_10 : f32 to vector<16x128xf32>
      %c0_11 = arith.constant 0 : index
      %c0_12 = arith.constant 0 : index
      %13 = vector.load %arg6[%c0_11, %c0_12] : memref<16x128xf32, #tpu.memory_space<vmem>>, vector<16x128xf32>
      tpu.vector_store %arg6[%c0_11, %c0_12], %12 {strides = array<i32>} : memref<16x128xf32, #tpu.memory_space<vmem>>, vector<16x128xf32>,
    } else {
    }
    %c0 = arith.constant 0 : index
    %c0_1 = arith.constant 0 : index
    %3 = vector.load %arg6[%c0, %c0_1] : memref<16x128xf32, #tpu.memory_space<vmem>>, vector<16x128xf32>
    %c0_2 = arith.constant 0 : index
    %c0_3 = arith.constant 0 : index
    %4 = vector.load %arg3[%c0_2, %c0_3] : memref<16x128xbf16, #tpu.memory_space<vmem>>, vector<16x128xbf16>
    %c0_4 = arith.constant 0 : index
    %c0_5 = arith.constant 0 : index
    %5 = vector.load %arg4[%c0_4, %c0_5] : memref<128x128xbf16, #tpu.memory_space<vmem>>, vector<128x128xbf16>
    %cst = arith.constant dense<0.000000e+00> : vector<16x128xf32>
    %6 = tpu.matmul %4, %5, %cst {dimension_numbers = #tpu.dot_dimension_numbers<[1], [0], [0], [1], [0, 0, 1, 1], [], []>} : vector<16x128xbf16>, vector<128x128xbf16>, vector<16x128xf32> -> vector<16x128xf32>
    %7 = arith.addf %3, %6 : vector<16x128xf32>
    %c0_6 = arith.constant 0 : index
    %c0_7 = arith.constant 0 : index
    %8 = vector.load %arg6[%c0_6, %c0_7] : memref<16x128xf32, #tpu.memory_space<vmem>>, vector<16x128xf32>
    tpu.vector_store %arg6[%c0_6, %c0_7], %7 {strides = array<i32>} : memref<16x128xf32, #tpu.memory_space<vmem>>, vector<16x128xf32>,
    %c0_i32_8 = arith.constant 0 : i32
    %9 = arith.cmpi eq, %arg2, %c0_i32_8 : i32
    %10 = arith.extui %9 : i1 to i32
    %c0_i32_9 = arith.constant 0 : i32
    %11 = arith.cmpi ne, %10, %c0_i32_9 : i32
    scf.if %11 {
      %c0_10 = arith.constant 0 : index
      %c0_11 = arith.constant 0 : index
      %12 = vector.load %arg6[%c0_10, %c0_11] : memref<16x128xf32, #tpu.memory_space<vmem>>, vector<16x128xf32>
      %c0_12 = arith.constant 0 : index
      %c0_13 = arith.constant 0 : index
      %13 = vector.load %arg5[%c0_12, %c0_13] : memref<16x128xf32, #tpu.memory_space<vmem>>, vector<16x128xf32>
      tpu.vector_store %arg5[%c0_12, %c0_13], %12 {strides = array<i32>} : memref<16x128xf32, #tpu.memory_space<vmem>>, vector<16x128xf32>,
    } else {
    }
    return
  }
  func.func @transform_0(%arg0: i32, %arg1: i32, %arg2: i32) -> (i32, i32) {
    %c0_i32 = arith.constant 0 : i32
    return %arg0, %arg2 : i32, i32
  }
  func.func @transform_1(%arg0: i32, %arg1: i32, %arg2: i32) -> (i32, i32) {
    %c0_i32 = arith.constant 0 : i32
    return %arg2, %arg1 : i32, i32
  }
  func.func @transform_2(%arg0: i32, %arg1: i32, %arg2: i32) -> (i32, i32) {
    %c0_i32 = arith.constant 0 : i32
    return %arg0, %arg1 : i32, i32
  }
}

</mosaic_0001>

<llo_original>
// kernel: tpu_custom_call.1
$region0: #{tpu_custom_call.1}
  #allocation0 [shape = 'u32[]', space=smem, size = 0x4, offset = 0x4, fixed_abs, tag = 'smem constant byte address 0x4 - core index']
  #allocation1 [shape = 'u32[72,128]{1,0:T(1,128)}', space=vmem, size = 0x9000, scoped, tag = 'internal scratch']
  #allocation2 [shape = 'f32[16,128]{1,0:T(8,128)}', space=vmem, size = 0x2000, scoped, tag = 'scratch operand']
  %s0 = inlined_call_operand.hbm [shape: bf16[32,128], index: 0, kind: input, shape index: {}]
  %s1 = inlined_call_operand.hbm [shape: bf16[128,128], index: 1, kind: input, shape index: {}]
  %s2 = inlined_call_operand.hbm [shape: f32[32,128], index: 2, kind: output, shape index: {}]
  %s3 = sld [smem:[#allocation0]]
  $region57: #{tpu_custom_call.1} parent=0
    _
  %s5 = ssub.s32 1, %s3
  %s6 = scalar_select 0, %s5, %s3
  $region1: #{tpu_custom_call.1} parent=0
    #allocation3 [shape = 'u8[8192]{0}', space=vmem, size = 0x2000, scoped, tag = 'input window, operand 0']
    #allocation4 [shape = 's32[2]{0}', space=sflag, size = 0x8, scoped, tag = 'scoped memory for tpu_custom_call.1']
    #allocation5 [shape = 's32[2]{0}', space=sflag, size = 0x8, scoped, tag = 'scoped memory for tpu_custom_call.1']
    #allocation6 [shape = 'u8[32768]{0}', space=vmem, size = 0x8000, scoped, tag = 'input window, operand 1, single buffered']
    #allocation7 [shape = 's32[1]{0}', space=sflag, size = 0x4, scoped, tag = 'scoped memory for tpu_custom_call.1']
    #allocation8 [shape = 'u8[16384]{0}', space=vmem, size = 0x4000, scoped, tag = 'output window, operand 0']
    %7 = vsyncpa [#allocation4], 0
    %s8 = scalar_lea.sflag [#allocation4], 1
    %9 = vsyncpa %s8, 0
    %10 = vsyncpa [#allocation7], 0
    %11 = vsyncpa [#allocation5], 0
    %s12 = scalar_lea.sflag [#allocation5], 1
    %13 = vsyncpa %s12, 0
    loop: start=0, step=1, limit=4
    $region2: #{tpu_custom_call.1} parent=1 // loop_pre_header
      _
    $region3: #{tpu_custom_call.1} parent=1 // loop_header
      %s15 = sphi 0, %s19
      %p16 = scmp.ge.s32.totalorder %s15, 4
      %s22 = sphi 0, %s41
      %s23 = sphi 0, %s37
      %s24 = sphi 0, %s33
      %s25 = sphi 0, %s22
      %s26 = sphi 0, %s23
      %s27 = sphi 0, %s24
      %s28 = sphi 0, %s25
      %s29 = sphi 0, %s26
      %s30 = sphi 0, %s27
      %s46 = sphi 0, %s48
      %s49 = sphi 0, %s46
      %s50 = sphi 0, %s49
      %s66 = sphi 0, %s50
      %s74 = sphi 0, %s76
      %s77 = sphi 0, %s74
      %s78 = sphi 0, %s77
      %s94 = sphi 0, %s78
      %s102 = sphi 0, %s104
      %s105 = sphi 0, %s102
      %s106 = sphi 0, %s105
      %s122 = sphi 0, %s106
    $region4: #{tpu_custom_call.1} parent=1 // loop_header_branch
      %18 = sbr.rel (%p16) target = $region8
    $region5: #{tpu_custom_call.1} parent=1 // loop_body
      %s20 = ssub.s32 %s15, 1
      %s21 = ssub.s32 %s15, 2
      %s31 = sadd.s32 1, %s24
      %p32 = scmp.ge.s32.totalorder %s31, 1
      %s33 = scalar_select %p32, 0, %s31
      %s34 = sadd.s32 1, %s23
      %s35 = scalar_select %p32, %s34, %s23
      %p36 = scmp.ge.s32.totalorder %s35, 1
      %s37 = scalar_select %p36, 0, %s35
      %s38 = sadd.s32 1, %s22
      %s39 = scalar_select %p36, %s38, %s22
      %p40 = scmp.ge.s32.totalorder %s39, 2
      %s41 = scalar_select %p40, 0, %s39
      %s42 = ssub.s32 %s22, %s41
      %s43 = ssub.s32 %s24, %s33
      %s44 = sor.u32 %s42, %s43
      %p45 = scmp.eq.s32.totalorder %s44, 0
      %s47 = sadd.s32 %s46, 1
      %s48 = scalar_select %p45, %s46, %s47
      %p51 = pneg %p45
      %p52 = scmp.eq.s32.totalorder %s15, 1
      %p53 = por %p51, %p52
      %p54 = scmp.ne.s32.totalorder %s46, %s49
      %p55 = scmp.eq.s32.totalorder %s15, 0
      %p56 = por %p54, %p55
      %p57 = scmp.ne.s32.totalorder %s46, %s49
      %p58 = scmp.eq.s32.totalorder %s20, 1
      %p59 = por %p57, %p58
      %p60 = scmp.ne.s32.totalorder %s49, %s50
      %p61 = scmp.eq.s32.totalorder %s20, 0
      %p62 = por %p60, %p61
      %p63 = scmp.ne.s32.totalorder %s49, %s50
      %p64 = scmp.eq.s32.totalorder %s21, 1
      %p65 = por %p63, %p64
      %p67 = scmp.ne.s32.totalorder %s50, %s66
      %p68 = scmp.eq.s32.totalorder %s21, 0
      %p69 = por %p67, %p68
      %s70 = ssub.s32 %s24, %s33
      %s71 = ssub.s32 %s23, %s37
      %s72 = sor.u32 %s70, %s71
      %p73 = scmp.eq.s32.totalorder %s72, 0
      %s75 = sadd.s32 %s74, 1
      %s76 = scalar_select %p73, %s74, %s75
      %p79 = pneg %p73
      %p80 = scmp.eq.s32.totalorder %s15, 1
      %p81 = por %p79, %p80
      %p82 = scmp.ne.s32.totalorder %s74, %s77
      %p83 = scmp.eq.s32.totalorder %s15, 0
      %p84 = por %p82, %p83
      %p85 = scmp.ne.s32.totalorder %s74, %s77
      %p86 = scmp.eq.s32.totalorder %s20, 1
      %p87 = por %p85, %p86
      %p88 = scmp.ne.s32.totalorder %s77, %s78
      %p89 = scmp.eq.s32.totalorder %s20, 0
      %p90 = por %p88, %p89
      %p91 = scmp.ne.s32.totalorder %s77, %s78
      %p92 = scmp.eq.s32.totalorder %s21, 1
      %p93 = por %p91, %p92
      %p95 = scmp.ne.s32.totalorder %s78, %s94
      %p96 = scmp.eq.s32.totalorder %s21, 0
      %p97 = por %p95, %p96
      %s98 = ssub.s32 %s22, %s41
      %s99 = ssub.s32 %s23, %s37
      %s100 = sor.u32 %s98, %s99
      %p101 = scmp.eq.s32.totalorder %s100, 0
      %s103 = sadd.s32 %s102, 1
      %s104 = scalar_select %p101, %s102, %s103
      %p107 = pneg %p101
      %p108 = scmp.eq.s32.totalorder %s15, 1
      %p109 = por %p107, %p108
      %p110 = scmp.ne.s32.totalorder %s102, %s105
      %p111 = scmp.eq.s32.totalorder %s15, 0
      %p112 = por %p110, %p111
      %p113 = scmp.ne.s32.totalorder %s102, %s105
      %p114 = scmp.eq.s32.totalorder %s20, 1
      %p115 = por %p113, %p114
      %p116 = scmp.ne.s32.totalorder %s105, %s106
      %p117 = scmp.eq.s32.totalorder %s20, 0
      %p118 = por %p116, %p117
      %p119 = scmp.ne.s32.totalorder %s105, %s106
      %p120 = scmp.eq.s32.totalorder %s21, 1
      %p121 = por %p119, %p120
      %p123 = scmp.ne.s32.totalorder %s106, %s122
      %p124 = scmp.eq.s32.totalorder %s21, 0
      %p125 = por %p123, %p124
      %p126 = scmp.le.s32.totalorder 1, %s15
      %p127 = scmp.lt.s32.totalorder %s15, 3
      %p128 = pnand %p126, %p127
      %p129 = pneg %p128
      // Predicated region
      $region9: #{tpu_custom_call.1} parent=5 // pred_check
        _
      $region10: #{tpu_custom_call.1} parent=5 // pred_check_branch
        %131 = sbr.rel (%p128) target = $region12
      $region11: #{tpu_custom_call.1} parent=5 // pred_region
        %s132 = ssub.s32 %s15, 1
        // Predicated region
        $region13: #{tpu_custom_call.1} parent=11 // pred_check
          %p133 = pneg %p90
        $region14: #{tpu_custom_call.1} parent=11 // pred_check_branch
          %135 = sbr.rel (%p133) target = $region16
        $region15: #{tpu_custom_call.1} parent=11 // pred_region
          %s136 = smul.u32 16, %s27
          %138 = vsyncadd [#allocation7], 0
          %s139 = sadd.s32 %s26, %s136
          %s140 = smul.addr %s139, 4
          %s141 = scalar_lea.hbm %s1, %s140
          %s142 = sshll.u32 %s141, 4
          %s143 = int_to_ptr.hbm [resolvable:$true] %s142
          %s144 = sshll.u32 [#allocation6], 4
          %s145 = int_to_ptr.vmem [resolvable:$true] %s144
          %150 = dma.hbm_to_vmem [thread:$0]  %s143, 1024, %s145, [#allocation7], 64, 64, 4
        $region16: #{tpu_custom_call.1} parent=11 // pred_fallthru
          _
      $region12: #{tpu_custom_call.1} parent=5 // pred_fallthru
        _
      %p151 = scmp.lt.s32.totalorder %s15, 2
      // Predicated region
      $region17: #{tpu_custom_call.1} parent=5 // pred_check
        %p152 = pneg %p151
      $region18: #{tpu_custom_call.1} parent=5 // pred_check_branch
        %154 = sbr.rel (%p152) target = $region20
      $region19: #{tpu_custom_call.1} parent=5 // pred_region
        // Predicated region
        $region21: #{tpu_custom_call.1} parent=19 // pred_check
          %p155 = pneg %p56
        $region22: #{tpu_custom_call.1} parent=19 // pred_check_branch
          %157 = sbr.rel (%p155) target = $region24
        $region23: #{tpu_custom_call.1} parent=19 // pred_region
          %s158 = sand.u32 %s46, 1
          %s159 = scalar_lea.sflag [#allocation4], %s158
          %s160 = sand.u32 %s46, 1
          %s161 = smul.addr %s160, 8
          %s162 = scalar_lea.vmem [#allocation3], %s161
          %s163 = smul.u32 2, %s22
          %165 = vsyncadd %s159, 0
          %s166 = sadd.s32 %s24, %s163
          %s167 = smul.addr %s166, 4
          %s168 = scalar_lea.hbm %s0, %s167
          %s169 = sshll.u32 %s168, 4
          %s170 = int_to_ptr.hbm [resolvable:$true] %s169
          %s171 = sshll.u32 %s162, 4
          %s172 = int_to_ptr.vmem [resolvable:$true] %s171
          %177 = dma.hbm_to_vmem [thread:$0]  %s170, 128, %s172, %s159, 64, 64, 4
        $region24: #{tpu_custom_call.1} parent=19 // pred_fallthru
          _
      $region20: #{tpu_custom_call.1} parent=5 // pred_fallthru
        _
      %p178 = scmp.le.s32.totalorder 1, %s15
      %p179 = scmp.lt.s32.totalorder %s15, 3
      %p180 = pnand %p178, %p179
      %p181 = pneg %p180
      // Predicated region
      $region25: #{tpu_custom_call.1} parent=5 // pred_check
        _
      $region26: #{tpu_custom_call.1} parent=5 // pred_check_branch
        %183 = sbr.rel (%p180) target = $region28
      $region27: #{tpu_custom_call.1} parent=5 // pred_region
        %s184 = ssub.s32 %s15, 1
        %s185 = sand.u32 %s49, 1
        %s186 = scalar_lea.sflag [#allocation4], %s185
        %s187 = sand.u32 %s49, 1
        %s188 = smul.addr %s187, 8
        %s189 = scalar_lea.vmem [#allocation3], %s188
        // Predicated region
        $region29: #{tpu_custom_call.1} parent=27 // pred_check
          %p190 = pneg %p62
        $region30: #{tpu_custom_call.1} parent=27 // pred_check_branch
          %192 = sbr.rel (%p190) target = $region32
        $region31: #{tpu_custom_call.1} parent=27 // pred_region
          %194 = dma.done %s186, 128
        $region32: #{tpu_custom_call.1} parent=27 // pred_fallthru
          _
        // Predicated region
        $region33: #{tpu_custom_call.1} parent=27 // pred_check
          %p195 = pneg %p90
        $region34: #{tpu_custom_call.1} parent=27 // pred_check_branch
          %197 = sbr.rel (%p195) target = $region36
        $region35: #{tpu_custom_call.1} parent=27 // pred_region
          %199 = dma.done [#allocation7], 1024
        $region36: #{tpu_custom_call.1} parent=27 // pred_fallthru
          _
        %s200 = sand.u32 %s49, 1
        %s201 = scalar_lea.sflag [#allocation4], %s200
        %s202 = sand.u32 %s49, 1
        %s203 = smul.addr %s202, 8
        %s204 = scalar_lea.vmem [#allocation3], %s203
        %p205 = pneg %p62
        %p206 = pneg %p59
        %p207 = pneg %p90
        %p208 = pneg %p87
        %p209 = pneg %p118
        %p210 = pneg %p115
        %s211 = sand.u32 %s105, 1
        %s212 = scalar_lea.sflag [#allocation5], %s211
        %s213 = sand.u32 %s105, 1
        %s214 = smul.addr %s213, 16
        %s215 = scalar_lea.vmem [#allocation8], %s214
        %s216 = smul.u32 2, %s25
        %s217 = smul.u32 16, %s27
        %s218 = smul.u32 2, %s25
        %p219 = scmp.eq.s32.totalorder %s27, 0
        // Predicated region
        $region37: #{tpu_custom_call.1} parent=27 // pred_check
          %p220 = pneg %p219
        $region38: #{tpu_custom_call.1} parent=27 // pred_check_branch
          %222 = sbr.rel (%p220) target = $region40
        $region39: #{tpu_custom_call.1} parent=27 // pred_region
          %223 = vst [vmem:[#allocation2] sm:$0xff] 0.0
          %224 = vst [vmem:[#allocation2 + $0x8] sm:$0xff] 0.0
        $region40: #{tpu_custom_call.1} parent=27 // pred_fallthru
          _
        %v225 = vld [vmem:[#allocation2] sm:$0xff]
        %v226 = vld [vmem:[#allocation2 + $0x8] sm:$0xff]
        %v227 = vld [vmem:[%s189] sm:$0xf]
        %v228 = vld [vmem:[%s189 + $0x4] sm:$0xf]
        %v229 = vld [vmem:[#allocation6] sm:$0xf]
        %v230 = vld [vmem:[#allocation6 + $0x4] sm:$0xf]
        %v231 = vld [vmem:[#allocation6 + $0x8] sm:$0xf]
        %v232 = vld [vmem:[#allocation6 + $0xc] sm:$0xf]
        %v233 = vld [vmem:[#allocation6 + $0x10] sm:$0xf]
        %v234 = vld [vmem:[#allocation6 + $0x14] sm:$0xf]
        %v235 = vld [vmem:[#allocation6 + $0x18] sm:$0xf]
        %v236 = vld [vmem:[#allocation6 + $0x1c] sm:$0xf]
        %v237 = vld [vmem:[#allocation6 + $0x20] sm:$0xf]
        %v238 = vld [vmem:[#allocation6 + $0x24] sm:$0xf]
        %v239 = vld [vmem:[#allocation6 + $0x28] sm:$0xf]
        %v240 = vld [vmem:[#allocation6 + $0x2c] sm:$0xf]
        %v241 = vld [vmem:[#allocation6 + $0x30] sm:$0xf]
        %v242 = vld [vmem:[#allocation6 + $0x34] sm:$0xf]
        %v243 = vld [vmem:[#allocation6 + $0x38] sm:$0xf]
        %v244 = vld [vmem:[#allocation6 + $0x3c] sm:$0xf]
        %v247 = vunpack.c.l.b16 %v227
        %v248 = vunpack.c.l.b16 %v228
        %v249 = vpack.c.b16 %v248, %v247
        %v267 = vunpack.c.l.b16 %v229
        %v268 = vunpack.c.l.b16 %v230
        %v269 = vunpack.c.l.b16 %v231
        %v270 = vunpack.c.l.b16 %v232
        %v271 = vunpack.c.l.b16 %v233
        %v272 = vunpack.c.l.b16 %v234
        %v273 = vunpack.c.l.b16 %v235
        %v274 = vunpack.c.l.b16 %v236
        %v275 = vunpack.c.l.b16 %v237
        %v276 = vunpack.c.l.b16 %v238
        %v277 = vunpack.c.l.b16 %v239
        %v278 = vunpack.c.l.b16 %v240
        %v279 = vunpack.c.l.b16 %v241
        %v280 = vunpack.c.l.b16 %v242
        %v281 = vunpack.c.l.b16 %v243
        %v282 = vunpack.c.l.b16 %v244
        %v283 = vpack.c.b16 %v268, %v267
        %v284 = vpack.c.b16 %v270, %v269
        %v285 = vpack.c.b16 %v272, %v271
        %v286 = vpack.c.b16 %v274, %v273
        %v287 = vpack.c.b16 %v276, %v275
        %v288 = vpack.c.b16 %v278, %v277
        %v289 = vpack.c.b16 %v280, %v279
        %v290 = vpack.c.b16 %v282, %v281
        %299 = vmatpush.bf16.msra.mxu0 %v290
        %300 = vmatpush.bf16.msra.mxu0 %v289
        %301 = vmatpush.bf16.msra.mxu0 %v288
        %302 = vmatpush.bf16.msra.mxu0 %v287
        %303 = vmatpush.bf16.msra.mxu0 %v286
        %304 = vmatpush.bf16.msra.mxu0 %v285
        %305 = vmatpush.bf16.msra.mxu0 %v284
        %306 = vmatpush.bf16.msra.mxu0 %v283
        %307 = vmatmul.bf16.gmra.mxu0 %v249
        %v308 = vpop.f32.mrf.mxu0
        %v309 = vadd.f32 0.0, %v308
        %v310 = vpop.f32.mrf.mxu0
        %v311 = vadd.f32 0.0, %v310
        %312 = vdwg.mxu0
        %v313 = vadd.f32 %v225, %v309
        %v314 = vadd.f32 %v226, %v311
        %315 = vst [vmem:[#allocation2] sm:$0xff] %v313
        %316 = vst [vmem:[#allocation2 + $0x8] sm:$0xff] %v314
        // Predicated region
        $region41: #{tpu_custom_call.1} parent=27 // pred_check
          %p317 = pneg %p219
        $region42: #{tpu_custom_call.1} parent=27 // pred_check_branch
          %319 = sbr.rel (%p317) target = $region44
        $region43: #{tpu_custom_call.1} parent=27 // pred_region
          %v320 = vld [vmem:[#allocation2] sm:$0xff]
          %v321 = vld [vmem:[#allocation2 + $0x8] sm:$0xff]
          %322 = vst [vmem:[%s215] sm:$0xff] %v320
          %323 = vst [vmem:[%s215 + $0x8] sm:$0xff] %v321
        $region44: #{tpu_custom_call.1} parent=27 // pred_fallthru
          _
        %s324 = sand.u32 %s105, 1
        %s325 = scalar_lea.sflag [#allocation5], %s324
        %s326 = sand.u32 %s105, 1
        %s327 = smul.addr %s326, 16
        %s328 = scalar_lea.vmem [#allocation8], %s327
        // Predicated region
        $region45: #{tpu_custom_call.1} parent=27 // pred_check
          %p329 = pneg %p115
        $region46: #{tpu_custom_call.1} parent=27 // pred_check_branch
          %331 = sbr.rel (%p329) target = $region48
        $region47: #{tpu_custom_call.1} parent=27 // pred_region
          %s332 = smul.u32 2, %s25
          %334 = vsyncadd %s325, 0
          %s335 = sadd.s32 %s26, %s332
          %s336 = smul.addr %s335, 8
          %s337 = scalar_lea.hbm %s2, %s336
          %s338 = sshll.u32 %s328, 4
          %s339 = int_to_ptr.vmem [resolvable:$true] %s338
          %s340 = sshll.u32 %s337, 4
          %s341 = int_to_ptr.hbm [resolvable:$true] %s340
          %346 = dma.vmem_to_hbm [thread:$0]  %s339, 256, %s341, %s325, 128, 128, 8
        $region48: #{tpu_custom_call.1} parent=27 // pred_fallthru
          _
      $region28: #{tpu_custom_call.1} parent=5 // pred_fallthru
        _
      %p347 = scmp.le.s32.totalorder 2, %s15
      // Predicated region
      $region49: #{tpu_custom_call.1} parent=5 // pred_check
        %p348 = pneg %p347
      $region50: #{tpu_custom_call.1} parent=5 // pred_check_branch
        %350 = sbr.rel (%p348) target = $region52
      $region51: #{tpu_custom_call.1} parent=5 // pred_region
        %s351 = ssub.s32 %s15, 2
        // Predicated region
        $region53: #{tpu_custom_call.1} parent=51 // pred_check
          %p352 = pneg %p121
        $region54: #{tpu_custom_call.1} parent=51 // pred_check_branch
          %354 = sbr.rel (%p352) target = $region56
        $region55: #{tpu_custom_call.1} parent=51 // pred_region
          %s355 = sand.u32 %s106, 1
          %s356 = scalar_lea.sflag [#allocation5], %s355
          %s357 = sand.u32 %s106, 1
          %s358 = smul.addr %s357, 16
          %s359 = scalar_lea.vmem [#allocation8], %s358
          %361 = dma.done %s356, 256
        $region56: #{tpu_custom_call.1} parent=51 // pred_fallthru
          _
      $region52: #{tpu_custom_call.1} parent=5 // pred_fallthru
        _
    $region6: #{tpu_custom_call.1} parent=1 // loop_footer
      %s19 = sadd.s32 1, %s15
    $region7: #{tpu_custom_call.1} parent=1 // loop_footer_branch
      %14 = sbr.rel target = $region3
    $region8: #{tpu_custom_call.1} parent=1 // loop_exit
      _
    %362 = vsyncpa [#allocation4], 1
    %s363 = scalar_lea.sflag [#allocation4], 1
    %364 = vsyncpa %s363, 1
    %365 = vsyncpa [#allocation7], 1
    %366 = vsyncpa [#allocation5], 1
    %s367 = scalar_lea.sflag [#allocation5], 1
    %368 = vsyncpa %s367, 1

</llo_original>
